<compile_context>
chip_gen: v7x
topology: tpu7x:2x2x1
jax: 0.10.0
libtpu: 0.0.40
codegen_flags: <defaults>
</compile_context>

<pallas_src>
import functools

import jax
import jax.numpy as jnp
from jax.experimental import pallas as pl
from jax.experimental.pallas import tpu as pltpu


def _norm_kernel(x_ref, k_ref, o_ref, *, eps, inv_c):
    # x_ref / o_ref: (1, C, T, 128) or (1, C, HW_TILE); k_ref: (1, C, 1[, 1]).
    # The channel (reduction) axis (axis=1) is fully inside every block.
    xf = x_ref[...].astype(jnp.float32)
    mean = jnp.sum(xf, axis=1, keepdims=True) * inv_c
    d = xf - mean
    # Two-pass variance: extra VMEM pass is free for an HBM-bound kernel and
    # avoids E[x^2] - E[x]^2 cancellation (unbiased=False semantics).
    var = jnp.sum(d * d, axis=1, keepdims=True) * inv_c
    inv = jax.lax.rsqrt(var + eps)                     # EUP rsqrt (free slot)
    k = k_ref[...].astype(jnp.float32)
    o_ref[...] = (d * inv * k).astype(o_ref.dtype)     # single cast at store


# Per-input-block byte target.  in+out blocks, double-buffered => ~4x this in
# VMEM (~16 MiB): inside the explicit 48 MiB limit on every generation (v7x
# physical VMEM is 64 MiB/TC, v5e/v6e 128 MiB) and large enough that the
# ~0.35 us fixed per-step overhead is <~10% even at v7x's 3.2 TB/s HBM.
_TARGET_BLOCK_BYTES = 4 * 1024 * 1024
_VMEM_LIMIT_BYTES = 48 * 1024 * 1024


def normalization_forward(x, k):
    """x: (N, C, H, W); k: (1, C, 1, 1).  Normalizes over the channel axis."""
    N, C, H, W = x.shape
    HW = H * W
    eps = 1e-05 if x.dtype == jnp.float32 else 1e-03
    itemsize = jnp.dtype(x.dtype).itemsize
    kernel = functools.partial(_norm_kernel, eps=eps, inv_c=1.0 / C)

    compiler_params = pltpu.CompilerParams(
        dimension_semantics=("parallel", "parallel"),
        vmem_limit_bytes=_VMEM_LIMIT_BYTES,
    )
    cost = pl.CostEstimate(                    # memory-bound hint for XLA
        flops=8 * N * C * HW,
        transcendentals=N * HW,
        bytes_accessed=2 * N * C * HW * itemsize + C * itemsize,
    )

    if HW % 128 == 0:
        # Preferred layout: (N, C, rows, 128).  C is an untiled leading block
        # dim -> no sublane padding regardless of C.
        rows = HW // 128
        row_align = max(8, 32 // itemsize)     # dtype sublane pack (8/16/32)
        bytes_per_row = C * 128 * itemsize
        rows_budget = max(1, _TARGET_BLOCK_BYTES // bytes_per_row)
        if rows_budget >= rows or rows <= row_align:
            tile_rows = rows                   # full extent: always legal
        else:
            tile_rows = max(row_align, (rows_budget // row_align) * row_align)
        # v7x megacore: if N == 1, force >= 2 HW blocks so both TCs get work.
        if N == 1 and tile_rows >= rows and rows >= 2 * row_align:
            tile_rows = max(
                row_align,
                (((rows + 1) // 2 + row_align - 1) // row_align) * row_align,
            )
        grid = (N, pl.cdiv(rows, tile_rows))

        out = pl.pallas_call(
            kernel,
            out_shape=jax.ShapeDtypeStruct((N, C, rows, 128), x.dtype),
            grid_spec=pltpu.PrefetchScalarGridSpec(
                num_scalar_prefetch=0,
                grid=grid,
                in_specs=[
                    pl.BlockSpec((1, C, tile_rows, 128),
                                 lambda n, t: (n, 0, t, 0)),
                    # Constant block index: k stays resident in VMEM.
                    pl.BlockSpec((1, C, 1, 1), lambda n, t: (0, 0, 0, 0)),
                ],
                out_specs=pl.BlockSpec((1, C, tile_rows, 128),
                                       lambda n, t: (n, 0, t, 0)),
            ),
            compiler_params=compiler_params,
            cost_estimate=cost,
        )(x.reshape(N, C, rows, 128), k.reshape(1, C, 1, 1))
        return out.reshape(N, C, H, W)

    # Fallback (HW not a multiple of 128): (N, C, HW), C on sublanes.  Size the
    # tile with the *padded* per-lane footprint: ceil(C/pack)*pack*itemsize.
    pack = 32 // itemsize
    padded_c_bytes = ((C + pack - 1) // pack) * pack * itemsize
    hw_tile = max(128, (_TARGET_BLOCK_BYTES // padded_c_bytes) // 128 * 128)
    if hw_tile >= HW:
        hw_tile = HW                           # full extent: always legal
        if N == 1 and HW > 128:
            # v7x megacore: split HW into >= 2 lane-aligned blocks.
            half = (((HW + 1) // 2) + 127) // 128 * 128
            if half < HW:
                hw_tile = half
    grid = (N, pl.cdiv(HW, hw_tile))

    out = pl.pallas_call(
        kernel,
        out_shape=jax.ShapeDtypeStruct((N, C, HW), x.dtype),
        grid_spec=pltpu.PrefetchScalarGridSpec(
            num_scalar_prefetch=0,
            grid=grid,
            in_specs=[
                pl.BlockSpec((1, C, hw_tile), lambda n, h: (n, 0, h)),
                pl.BlockSpec((1, C, 1), lambda n, h: (0, 0, 0)),
            ],
            out_specs=pl.BlockSpec((1, C, hw_tile), lambda n, h: (n, 0, h)),
        ),
        compiler_params=compiler_params,
        cost_estimate=cost,
    )(x.reshape(N, C, HW), k.reshape(1, C, 1))
    return out.reshape(N, C, H, W)


def _reference(x, k):
    eps = 1e-05 if x.dtype == jnp.float32 else 1e-03
    mean = jnp.mean(x, axis=1, keepdims=True)
    var = jnp.mean((x - mean) ** 2, axis=1, keepdims=True)
    return (x - mean) * jax.lax.rsqrt(var + eps) * k


if __name__ == "__main__":
    key = jax.random.PRNGKey(0)
    N, C, H, W = 2, 4, 16, 16
    x = jax.random.normal(key, (N, C, H, W), dtype=jnp.float32)
    # Deterministic parameter init: module initializes k = ones(1, dim, 1, 1)
    k = jnp.ones((1, C, 1, 1), dtype=jnp.float32)

    out = normalization_forward(x, k)
    out = jax.block_until_ready(out)

    ref = _reference(x, k)
    assert out.shape == (N, C, H, W)
    assert jnp.allclose(out, ref, atol=1e-5, rtol=1e-5)
    print("KERNEL_OK")
</pallas_src>

<mosaic_0001>
module attributes {stable_mosaic.version = 11 : i64} {
  func.func @_norm_kernel(%arg0: i32, %arg1: i32, %arg2: memref<1x4x2x128xf32, #tpu.memory_space<vmem>>, %arg3: memref<1x4x1x1xf32, #tpu.memory_space<vmem>>, %arg4: memref<1x4x2x128xf32, #tpu.memory_space<vmem>>) attributes {dimension_semantics = [#tpu.dimension_semantics<parallel>, #tpu.dimension_semantics<parallel>], iteration_bounds = array<i64: 2, 1>, scalar_prefetch = 0 : i64, scratch_operands = 0 : i64, tpu.core_type = #tpu.core_type<tc>, window_params = [{transform_indices = @transform_0, window_bounds = array<i64: 1, 4, 2, 128>}, {pipeline_mode = #tpu.pipeline_mode<synchronous>, transform_indices = @transform_1, window_bounds = array<i64: 1, 4, 1, 1>}, {transform_indices = @transform_2, window_bounds = array<i64: 1, 4, 2, 128>}]} {
    %c0 = arith.constant 0 : index
    %c0_0 = arith.constant 0 : index
    %c0_1 = arith.constant 0 : index
    %c0_2 = arith.constant 0 : index
    %0 = vector.load %arg2[%c0, %c0_0, %c0_1, %c0_2] : memref<1x4x2x128xf32, #tpu.memory_space<vmem>>, vector<1x4x2x128xf32>
    %cst = arith.constant dense<0.000000e+00> : vector<1x2x128xf32>
    %1 = vector.multi_reduction <add>, %0, %cst [1] : vector<1x4x2x128xf32> to vector<1x2x128xf32>
    %2 = vector.shape_cast %1 : vector<1x2x128xf32> to vector<1x1x2x128xf32>
    %cst_3 = arith.constant 2.500000e-01 : f32
    %3 = vector.broadcast %cst_3 : f32 to vector<1x1x2x128xf32>
    %4 = arith.mulf %2, %3 : vector<1x1x2x128xf32>
    %5 = vector.broadcast %4 : vector<1x1x2x128xf32> to vector<1x4x2x128xf32>
    %6 = arith.subf %0, %5 : vector<1x4x2x128xf32>
    %7 = arith.mulf %6, %6 : vector<1x4x2x128xf32>
    %cst_4 = arith.constant dense<0.000000e+00> : vector<1x2x128xf32>
    %8 = vector.multi_reduction <add>, %7, %cst_4 [1] : vector<1x4x2x128xf32> to vector<1x2x128xf32>
    %9 = vector.shape_cast %8 : vector<1x2x128xf32> to vector<1x1x2x128xf32>
    %cst_5 = arith.constant 2.500000e-01 : f32
    %10 = vector.broadcast %cst_5 : f32 to vector<1x1x2x128xf32>
    %11 = arith.mulf %9, %10 : vector<1x1x2x128xf32>
    %cst_6 = arith.constant 9.99999974E-6 : f32
    %12 = vector.broadcast %cst_6 : f32 to vector<1x1x2x128xf32>
    %13 = arith.addf %11, %12 : vector<1x1x2x128xf32>
    %14 = math.rsqrt %13 : vector<1x1x2x128xf32>
    %c0_7 = arith.constant 0 : index
    %c0_8 = arith.constant 0 : index
    %c0_9 = arith.constant 0 : index
    %c0_10 = arith.constant 0 : index
    %15 = vector.load %arg3[%c0_7, %c0_8, %c0_9, %c0_10] : memref<1x4x1x1xf32, #tpu.memory_space<vmem>>, vector<1x4x1x1xf32>
    %16 = vector.broadcast %14 : vector<1x1x2x128xf32> to vector<1x4x2x128xf32>
    %17 = arith.mulf %6, %16 : vector<1x4x2x128xf32>
    %18 = vector.broadcast %15 : vector<1x4x1x1xf32> to vector<1x4x2x128xf32>
    %19 = arith.mulf %17, %18 : vector<1x4x2x128xf32>
    %c0_11 = arith.constant 0 : index
    %c0_12 = arith.constant 0 : index
    %c0_13 = arith.constant 0 : index
    %c0_14 = arith.constant 0 : index
    %20 = vector.load %arg4[%c0_11, %c0_12, %c0_13, %c0_14] : memref<1x4x2x128xf32, #tpu.memory_space<vmem>>, vector<1x4x2x128xf32>
    tpu.vector_store %arg4[%c0_11, %c0_12, %c0_13, %c0_14], %19 {strides = array<i32>} : memref<1x4x2x128xf32, #tpu.memory_space<vmem>>, vector<1x4x2x128xf32>,
    return
  }
  func.func @transform_0(%arg0: i32, %arg1: i32) -> (i32, i32, i32, i32) {
    %c0_i32 = arith.constant 0 : i32
    %c0_i32_0 = arith.constant 0 : i32
    %c0_i32_1 = arith.constant 0 : i32
    return %arg0, %c0_i32, %arg1, %c0_i32_0 : i32, i32, i32, i32
  }
  func.func @transform_1(%arg0: i32, %arg1: i32) -> (i32, i32, i32, i32) {
    %c0_i32 = arith.constant 0 : i32
    %c0_i32_0 = arith.constant 0 : i32
    %c0_i32_1 = arith.constant 0 : i32
    %c0_i32_2 = arith.constant 0 : i32
    %c0_i32_3 = arith.constant 0 : i32
    return %c0_i32, %c0_i32_0, %c0_i32_1, %c0_i32_2 : i32, i32, i32, i32
  }
  func.func @transform_2(%arg0: i32, %arg1: i32) -> (i32, i32, i32, i32) {
    %c0_i32 = arith.constant 0 : i32
    %c0_i32_0 = arith.constant 0 : i32
    %c0_i32_1 = arith.constant 0 : i32
    return %arg0, %c0_i32, %arg1, %c0_i32_0 : i32, i32, i32, i32
  }
}

</mosaic_0001>

<llo_original>
// kernel: tpu_custom_call.1
$region0: #{tpu_custom_call.1}
  #allocation0 [shape = 'u32[]', space=smem, size = 0x4, offset = 0x4, fixed_abs, tag = 'smem constant byte address 0x4 - core index']
  #allocation1 [shape = 'u32[144,128]{1,0:T(1,128)}', space=vmem, size = 0x12000, scoped, tag = 'internal scratch']
  %s0 = inlined_call_operand.hbm [shape: f32[2,4,2,128], index: 0, kind: input, shape index: {}]
  %s1 = inlined_call_operand.vmem [shape: f32[1,4,1,1], index: 1, kind: input, shape index: {}]
  %s2 = inlined_call_operand.hbm [shape: f32[2,4,2,128], index: 2, kind: output, shape index: {}]
  %s3 = sld [smem:[#allocation0]]
  $region45: #{tpu_custom_call.1} parent=0
    _
  %s5 = ssub.s32 1, %s3
  %s6 = scalar_select 0, %s5, %s3
  $region1: #{tpu_custom_call.1} parent=0
    #allocation2 [shape = 'u8[8192]{0}', space=vmem, size = 0x2000, scoped, tag = 'input window, operand 0']
    #allocation3 [shape = 's32[2]{0}', space=sflag, size = 0x8, scoped, tag = 'scoped memory for tpu_custom_call.1']
    #allocation4 [shape = 's32[2]{0}', space=sflag, size = 0x8, scoped, tag = 'scoped memory for tpu_custom_call.1']
    #allocation5 [shape = 'u8[8192]{0}', space=vmem, size = 0x2000, scoped, tag = 'output window, operand 0']
    %7 = vsyncpa [#allocation3], 0
    %s8 = scalar_lea.sflag [#allocation3], 1
    %9 = vsyncpa %s8, 0
    %10 = vsyncpa [#allocation4], 0
    %s11 = scalar_lea.sflag [#allocation4], 1
    %12 = vsyncpa %s11, 0
    loop: start=0, step=1, limit=4
    $region2: #{tpu_custom_call.1} parent=1 // loop_pre_header
      _
    $region3: #{tpu_custom_call.1} parent=1 // loop_header
      %s14 = sphi 0, %s18
      %p15 = scmp.ge.s32.totalorder %s14, 4
      %s21 = sphi 0, %s33
      %s22 = sphi 0, %s29
      %s23 = sphi 0, %s21
      %s24 = sphi 0, %s22
      %s25 = sphi 0, %s23
      %s26 = sphi 0, %s24
      %s38 = sphi 0, %s40
      %s41 = sphi 0, %s38
      %s42 = sphi 0, %s41
      %s58 = sphi 0, %s42
      %s62 = sphi 0, %s62
      %s64 = sphi 0, %s62
      %s65 = sphi 0, %s64
      %s79 = sphi 0, %s65
      %s87 = sphi 0, %s89
      %s90 = sphi 0, %s87
      %s91 = sphi 0, %s90
      %s107 = sphi 0, %s91
    $region4: #{tpu_custom_call.1} parent=1 // loop_header_branch
      %17 = sbr.rel (%p15) target = $region8
    $region5: #{tpu_custom_call.1} parent=1 // loop_body
      %s19 = ssub.s32 %s14, 1
      %s20 = ssub.s32 %s14, 2
      %s27 = sadd.s32 1, %s22
      %p28 = scmp.ge.s32.totalorder %s27, 1
      %s29 = scalar_select %p28, 0, %s27
      %s30 = sadd.s32 1, %s21
      %s31 = scalar_select %p28, %s30, %s21
      %p32 = scmp.ge.s32.totalorder %s31, 2
      %s33 = scalar_select %p32, 0, %s31
      %s34 = ssub.s32 %s21, %s33
      %s35 = ssub.s32 %s22, %s29
      %s36 = sor.u32 %s34, %s35
      %p37 = scmp.eq.s32.totalorder %s36, 0
      %s39 = sadd.s32 %s38, 1
      %s40 = scalar_select %p37, %s38, %s39
      %p43 = pneg %p37
      %p44 = scmp.eq.s32.totalorder %s14, 1
      %p45 = por %p43, %p44
      %p46 = scmp.ne.s32.totalorder %s38, %s41
      %p47 = scmp.eq.s32.totalorder %s14, 0
      %p48 = por %p46, %p47
      %p49 = scmp.ne.s32.totalorder %s38, %s41
      %p50 = scmp.eq.s32.totalorder %s19, 1
      %p51 = por %p49, %p50
      %p52 = scmp.ne.s32.totalorder %s41, %s42
      %p53 = scmp.eq.s32.totalorder %s19, 0
      %p54 = por %p52, %p53
      %p55 = scmp.ne.s32.totalorder %s41, %s42
      %p56 = scmp.eq.s32.totalorder %s20, 1
      %p57 = por %p55, %p56
      %p59 = scmp.ne.s32.totalorder %s42, %s58
      %p60 = scmp.eq.s32.totalorder %s20, 0
      %p61 = por %p59, %p60
      %s63 = sadd.s32 %s62, 1
      %p66 = scmp.eq.s32.totalorder %s14, 1
      %p67 = scmp.ne.s32.totalorder %s62, %s64
      %p68 = scmp.eq.s32.totalorder %s14, 0
      %p69 = por %p67, %p68
      %p70 = scmp.ne.s32.totalorder %s62, %s64
      %p71 = scmp.eq.s32.totalorder %s19, 1
      %p72 = por %p70, %p71
      %p73 = scmp.ne.s32.totalorder %s64, %s65
      %p74 = scmp.eq.s32.totalorder %s19, 0
      %p75 = por %p73, %p74
      %p76 = scmp.ne.s32.totalorder %s64, %s65
      %p77 = scmp.eq.s32.totalorder %s20, 1
      %p78 = por %p76, %p77
      %p80 = scmp.ne.s32.totalorder %s65, %s79
      %p81 = scmp.eq.s32.totalorder %s20, 0
      %p82 = por %p80, %p81
      %s83 = ssub.s32 %s21, %s33
      %s84 = ssub.s32 %s22, %s29
      %s85 = sor.u32 %s83, %s84
      %p86 = scmp.eq.s32.totalorder %s85, 0
      %s88 = sadd.s32 %s87, 1
      %s89 = scalar_select %p86, %s87, %s88
      %p92 = pneg %p86
      %p93 = scmp.eq.s32.totalorder %s14, 1
      %p94 = por %p92, %p93
      %p95 = scmp.ne.s32.totalorder %s87, %s90
      %p96 = scmp.eq.s32.totalorder %s14, 0
      %p97 = por %p95, %p96
      %p98 = scmp.ne.s32.totalorder %s87, %s90
      %p99 = scmp.eq.s32.totalorder %s19, 1
      %p100 = por %p98, %p99
      %p101 = scmp.ne.s32.totalorder %s90, %s91
      %p102 = scmp.eq.s32.totalorder %s19, 0
      %p103 = por %p101, %p102
      %p104 = scmp.ne.s32.totalorder %s90, %s91
      %p105 = scmp.eq.s32.totalorder %s20, 1
      %p106 = por %p104, %p105
      %p108 = scmp.ne.s32.totalorder %s91, %s107
      %p109 = scmp.eq.s32.totalorder %s20, 0
      %p110 = por %p108, %p109
      %p111 = scmp.le.s32.totalorder 1, %s14
      %p112 = scmp.lt.s32.totalorder %s14, 3
      %p113 = pnand %p111, %p112
      %p114 = pneg %p113
      // Predicated region
      $region9: #{tpu_custom_call.1} parent=5 // pred_check
        _
      $region10: #{tpu_custom_call.1} parent=5 // pred_check_branch
        %116 = sbr.rel (%p113) target = $region12
      $region11: #{tpu_custom_call.1} parent=5 // pred_region
        %s117 = ssub.s32 %s14, 1
        // Predicated region
        $region13: #{tpu_custom_call.1} parent=11 // pred_check
          %p118 = pneg %p75
        $region14: #{tpu_custom_call.1} parent=11 // pred_check_branch
          %120 = sbr.rel (%p118) target = $region16
        $region15: #{tpu_custom_call.1} parent=11 // pred_region
          _
        $region16: #{tpu_custom_call.1} parent=11 // pred_fallthru
          _
      $region12: #{tpu_custom_call.1} parent=5 // pred_fallthru
        _
      %p121 = scmp.lt.s32.totalorder %s14, 2
      // Predicated region
      $region17: #{tpu_custom_call.1} parent=5 // pred_check
        %p122 = pneg %p121
      $region18: #{tpu_custom_call.1} parent=5 // pred_check_branch
        %124 = sbr.rel (%p122) target = $region20
      $region19: #{tpu_custom_call.1} parent=5 // pred_region
        // Predicated region
        $region21: #{tpu_custom_call.1} parent=19 // pred_check
          %p125 = pneg %p48
        $region22: #{tpu_custom_call.1} parent=19 // pred_check_branch
          %127 = sbr.rel (%p125) target = $region24
        $region23: #{tpu_custom_call.1} parent=19 // pred_region
          %s128 = sand.u32 %s38, 1
          %s129 = scalar_lea.sflag [#allocation3], %s128
          %s130 = sand.u32 %s38, 1
          %s131 = smul.addr %s130, 8
          %s132 = scalar_lea.vmem [#allocation2], %s131
          %s134 = ssub.s32 128, 128
          %135 = vsyncadd %s129, %s134
          %s136 = smul.addr %s21, 4
          %s137 = sadd.s32 %s22, %s136
          %s138 = smul.addr %s137, 32
          %s139 = scalar_lea.hbm %s0, %s138
          %s140 = sshll.u32 %s132, 4
          %s141 = int_to_ptr.vmem [resolvable:$true] %s140
          %146 = dma.hbm_to_vmem [thread:$0]  %s139, 128, %s141, %s129, 32, 32, 2
        $region24: #{tpu_custom_call.1} parent=19 // pred_fallthru
          _
      $region20: #{tpu_custom_call.1} parent=5 // pred_fallthru
        _
      %p147 = scmp.le.s32.totalorder 1, %s14
      %p148 = scmp.lt.s32.totalorder %s14, 3
      %p149 = pnand %p147, %p148
      %p150 = pneg %p149
      // Predicated region
      $region25: #{tpu_custom_call.1} parent=5 // pred_check
        _
      $region26: #{tpu_custom_call.1} parent=5 // pred_check_branch
        %152 = sbr.rel (%p149) target = $region28
      $region27: #{tpu_custom_call.1} parent=5 // pred_region
        %s153 = ssub.s32 %s14, 1
        %s154 = sand.u32 %s41, 1
        %s155 = scalar_lea.sflag [#allocation3], %s154
        %s156 = sand.u32 %s41, 1
        %s157 = smul.addr %s156, 8
        %s158 = scalar_lea.vmem [#allocation2], %s157
        // Predicated region
        $region29: #{tpu_custom_call.1} parent=27 // pred_check
          %p159 = pneg %p54
        $region30: #{tpu_custom_call.1} parent=27 // pred_check_branch
          %161 = sbr.rel (%p159) target = $region32
        $region31: #{tpu_custom_call.1} parent=27 // pred_region
          %162 = dma.done %s155, 128
        $region32: #{tpu_custom_call.1} parent=27 // pred_fallthru
          _
        %s163 = sand.u32 %s41, 1
        %s164 = scalar_lea.sflag [#allocation3], %s163
        %s165 = sand.u32 %s41, 1
        %s166 = smul.addr %s165, 8
        %s167 = scalar_lea.vmem [#allocation2], %s166
        %p168 = pneg %p54
        %p169 = pneg %p51
        %p170 = pneg %p75
        %p171 = pneg %p72
        %p172 = pneg %p103
        %p173 = pneg %p100
        %s174 = sand.u32 %s90, 1
        %s175 = scalar_lea.sflag [#allocation4], %s174
        %s176 = sand.u32 %s90, 1
        %s177 = smul.addr %s176, 8
        %s178 = scalar_lea.vmem [#allocation5], %s177
        %v179 = vld [vmem:[%s158] sm:$0x3]
        %v180 = vld [vmem:[%s158 + $0x2] sm:$0x3]
        %v181 = vld [vmem:[%s158 + $0x4] sm:$0x3]
        %v182 = vld [vmem:[%s158 + $0x6] sm:$0x3]
        %vm183 = vcmask 1041408
        %v184 = vsel %vm183, %v179, 0.0
        %v185 = vsel %vm183, %v180, 0.0
        %v186 = vadd.f32 %v184, %v185
        %v187 = vsel %vm183, %v181, 0.0
        %v188 = vadd.f32 %v186, %v187
        %v189 = vsel %vm183, %v182, 0.0
        %v190 = vadd.f32 %v188, %v189
        %v191 = vmul.f32 %v190, 0.25
        %v192 = vsub.f32 %v179, %v191
        %v193 = vsub.f32 %v180, %v191
        %v194 = vsub.f32 %v181, %v191
        %v195 = vsub.f32 %v182, %v191
        %v196 = vmul.f32 %v192, %v192
        %v197 = vmul.f32 %v193, %v193
        %v198 = vmul.f32 %v194, %v194
        %v199 = vmul.f32 %v195, %v195
        %v200 = vsel %vm183, %v196, 0.0
        %v201 = vsel %vm183, %v197, 0.0
        %v202 = vadd.f32 %v200, %v201
        %v203 = vsel %vm183, %v198, 0.0
        %v204 = vadd.f32 %v202, %v203
        %v205 = vsel %vm183, %v199, 0.0
        %v206 = vadd.f32 %v204, %v205
        %v207 = vmul.f32 %v206, 0.25
        %v208 = vadd.f32 %v207, 1e-05
        %v209 = vrsqrt.pop %v208
        %v210 = vld [vmem:[%s1] sm:$0x1]
        %v211 = vld [vmem:[%s1 + $0x1] sm:$0x1]
        %v212 = vld [vmem:[%s1 + $0x2] sm:$0x1]
        %v213 = vld [vmem:[%s1 + $0x3] sm:$0x1]
        %v214 = vmul.f32 %v192, %v209
        %v215 = vmul.f32 %v193, %v209
        %v216 = vmul.f32 %v194, %v209
        %v217 = vmul.f32 %v195, %v209
        %v222 = vlaneseq
        %v223 = vshrl.u32 %v222, 7
        %v224 = vsub.s32 0, %v223
        %v225 = vrot.slane %v210, %v224
        %v226 = vlaneseq
        %v227 = vshrl.u32 %v226, 7
        %v228 = vsub.s32 0, %v227
        %v229 = vrot.slane %v211, %v228
        %v230 = vlaneseq
        %v231 = vshrl.u32 %v230, 7
        %v232 = vsub.s32 0, %v231
        %v233 = vrot.slane %v212, %v232
        %v234 = vlaneseq
        %v235 = vshrl.u32 %v234, 7
        %v236 = vsub.s32 0, %v235
        %v237 = vrot.slane %v213, %v236
        %238 = vset.pattern.permute.xlu0 0
        %239 = vperm.xlu0 %238, %v225
        %v240 = vpop.permute.xlu0 %239
        %242 = vset.pattern.permute.xlu0 0
        %243 = vperm.xlu0 %242, %v229
        %v244 = vpop.permute.xlu0 %243
        %246 = vset.pattern.permute.xlu0 0
        %247 = vperm.xlu0 %246, %v233
        %v248 = vpop.permute.xlu0 %247
        %250 = vset.pattern.permute.xlu0 0
        %251 = vperm.xlu0 %250, %v237
        %v252 = vpop.permute.xlu0 %251
        %v254 = vmul.f32 %v214, %v240
        %v255 = vmul.f32 %v215, %v244
        %v256 = vmul.f32 %v216, %v248
        %v257 = vmul.f32 %v217, %v252
        %258 = vst [vmem:[%s178] sm:$0x3] %v254
        %259 = vst [vmem:[%s178 + $0x2] sm:$0x3] %v255
        %260 = vst [vmem:[%s178 + $0x4] sm:$0x3] %v256
        %261 = vst [vmem:[%s178 + $0x6] sm:$0x3] %v257
        %s262 = sand.u32 %s90, 1
        %s263 = scalar_lea.sflag [#allocation4], %s262
        %s264 = sand.u32 %s90, 1
        %s265 = smul.addr %s264, 8
        %s266 = scalar_lea.vmem [#allocation5], %s265
        // Predicated region
        $region33: #{tpu_custom_call.1} parent=27 // pred_check
          %p267 = pneg %p100
        $region34: #{tpu_custom_call.1} parent=27 // pred_check_branch
          %269 = sbr.rel (%p267) target = $region36
        $region35: #{tpu_custom_call.1} parent=27 // pred_region
          %s271 = ssub.s32 128, 128
          %272 = vsyncadd %s263, %s271
          %s273 = smul.addr %s23, 4
          %s274 = sadd.s32 %s24, %s273
          %s275 = smul.addr %s274, 32
          %s276 = scalar_lea.hbm %s2, %s275
          %s277 = sshll.u32 %s266, 4
          %s278 = int_to_ptr.vmem [resolvable:$true] %s277
          %283 = dma.vmem_to_hbm [thread:$0]  %s278, 128, %s276, %s263, 32, 32, 2
        $region36: #{tpu_custom_call.1} parent=27 // pred_fallthru
          _
      $region28: #{tpu_custom_call.1} parent=5 // pred_fallthru
        _
      %p284 = scmp.le.s32.totalorder 2, %s14
      // Predicated region
      $region37: #{tpu_custom_call.1} parent=5 // pred_check
        %p285 = pneg %p284
      $region38: #{tpu_custom_call.1} parent=5 // pred_check_branch
        %287 = sbr.rel (%p285) target = $region40
      $region39: #{tpu_custom_call.1} parent=5 // pred_region
        %s288 = ssub.s32 %s14, 2
        // Predicated region
        $region41: #{tpu_custom_call.1} parent=39 // pred_check
          %p289 = pneg %p106
        $region42: #{tpu_custom_call.1} parent=39 // pred_check_branch
          %291 = sbr.rel (%p289) target = $region44
        $region43: #{tpu_custom_call.1} parent=39 // pred_region
          %s292 = sand.u32 %s91, 1
          %s293 = scalar_lea.sflag [#allocation4], %s292
          %s294 = sand.u32 %s91, 1
          %s295 = smul.addr %s294, 8
          %s296 = scalar_lea.vmem [#allocation5], %s295
          %297 = dma.done %s293, 128
        $region44: #{tpu_custom_call.1} parent=39 // pred_fallthru
          _
      $region40: #{tpu_custom_call.1} parent=5 // pred_fallthru
        _
    $region6: #{tpu_custom_call.1} parent=1 // loop_footer
      %s18 = sadd.s32 1, %s14
    $region7: #{tpu_custom_call.1} parent=1 // loop_footer_branch
      %13 = sbr.rel target = $region3
    $region8: #{tpu_custom_call.1} parent=1 // loop_exit
      _
    %298 = vsyncpa [#allocation3], 1
    %s299 = scalar_lea.sflag [#allocation3], 1
    %300 = vsyncpa %s299, 1
    %301 = vsyncpa [#allocation4], 1
    %s302 = scalar_lea.sflag [#allocation4], 1
    %303 = vsyncpa %s302, 1

</llo_original>
